<compile_context>
chip_gen: v7x
topology: tpu7x:2x2x1
jax: 0.10.0
libtpu: 0.0.40
codegen_flags: <defaults>
</compile_context>

<pallas_src>
import jax
import jax.numpy as jnp
from jax.experimental import pallas as pl
from jax.experimental.pallas import tpu as pltpu


def _rolloff_kernel(scale_ref, wt_ref, x_ref, o_ref):
    # scale_ref: (1,1) f32 in SMEM  -- rolloff_freq / L (exact f32 scale)
    # wt_ref:    (gL, g) one-hot segment matrix, VMEM-resident across steps
    # x_ref:     (tile, gL) packed input rows
    # o_ref:     (tile, g)  o[r, k] = mean(original row r*g + k) * rolloff
    x = x_ref[...]
    wt = wt_ref[...]
    if x.dtype != wt.dtype:
        x = x.astype(wt.dtype)
    # (tile, gL) @ (gL, g): LHS contracts on its lane dim, RHS on its sublane
    # dim -> natural MXU orientation, no transpose of the big x tile.
    acc = jnp.dot(x, wt, preferred_element_type=jnp.float32)
    o_ref[...] = (acc * scale_ref[0, 0]).astype(o_ref.dtype)


def _round_up(a, b):
    return (a + b - 1) // b * b


def _vmem_capacity_bytes():
    try:
        return int(pltpu.get_tpu_info().vmem_capacity_bytes)
    except Exception:
        return 64 * 1024 * 1024  # conservative default (v7x per-core VMEM)


def spectral_rolloff(x, rolloff_freq=0.85, *, min_pallas_bytes=1 << 20,
                     _force_tile=None):
    """Equivalent to torch.mean(x, dim=-1) * rolloff_freq."""
    orig_shape = x.shape
    L = int(orig_shape[-1])
    lead = orig_shape[:-1]
    R = 1
    for d in lead:
        R *= int(d)
    itemsize = jnp.dtype(x.dtype).itemsize

    def _xla_fallback():
        r = jnp.asarray(rolloff_freq, jnp.float32)
        return (jnp.mean(x.astype(jnp.float32), axis=-1) * r).astype(x.dtype)

    # Tiny inputs: fixed pallas_call / grid-step overhead exceeds the reduce.
    if R == 0 or L == 0 or x.size * itemsize < min_pallas_bytes:
        return _xla_fallback()

    # ---- fold short reduce axes into full 128-wide lanes -------------------
    g_max = max(1, 128 // L)
    g = 1
    for cand in range(g_max, 0, -1):
        if R % cand == 0:
            g = cand
            break
    gL = g * L
    Rp = R // g                      # packed rows (each holds g original rows)

    # ---- VMEM-proportional tile sizing --------------------------------------
    # Per-row VMEM footprint with lane padding (last dim padded to 128 lanes):
    # double-buffered input row + double-buffered output row + f32 acc row.
    in_row = _round_up(gL, 128) * itemsize
    out_row = _round_up(g, 128) * itemsize
    acc_row = _round_up(g, 128) * 4
    per_row = 2 * in_row + 2 * out_row + acc_row

    vmem_cap = _vmem_capacity_bytes()                        # 128 MiB v5e/v6e, 64 MiB v7x
    vmem_limit = int(min(vmem_cap // 2, 64 * 1024 * 1024))   # 64 / 32 MiB scoped
    usable = (vmem_limit * 3) // 4                           # headroom for W + temps
    max_tile = (usable // per_row) // 128 * 128
    if max_tile == 0:
        max_tile = (usable // per_row) // 8 * 8              # very long rows
    if max_tile == 0:
        # TODO(synk): tile the reduce axis itself for extremely long rows.
        return _xla_fallback()

    in_bytes = Rp * in_row
    if _force_tile is not None:
        tile = int(min(_force_tile, Rp))       # test hook (use a multiple of 128)
    elif Rp > max_tile:
        nt = pl.cdiv(Rp, max_tile)
        nt += nt & 1                           # even, near-equal tiles (v7x megacore)
        tile = min(max_tile, _round_up(pl.cdiv(Rp, nt), 128))
    elif Rp >= 512 and in_bytes >= (4 << 20):
        tile = min(Rp, _round_up(pl.cdiv(Rp, 4), 128))   # >=2 blocks per TensorCore
    elif Rp >= 256 and in_bytes >= (2 << 20):
        tile = min(Rp, _round_up(pl.cdiv(Rp, 2), 128))
    else:
        tile = Rp                              # single full-extent block (always legal)
    num_tiles = pl.cdiv(Rp, tile)

    # ---- operands ------------------------------------------------------------
    # W^T: exact 0/1 one-hot segment matrix; wt[j, k] = [j // L == k].
    w_dtype = jnp.bfloat16 if x.dtype == jnp.bfloat16 else jnp.float32
    seg = jnp.arange(gL, dtype=jnp.int32) // L
    wt = (seg[:, None] == jnp.arange(g, dtype=jnp.int32)[None, :]).astype(w_dtype)
    # rolloff/L applied post-matmul in f32 (SMEM scalar): no bf16 scale error,
    # and the kernel/W don't depend on the rolloff value.
    scale = jnp.full((1, 1), float(rolloff_freq) / float(L), dtype=jnp.float32)

    x_packed = x.reshape(Rp, gL)     # row-major metadata reshape (free)

    out2d = pl.pallas_call(
        _rolloff_kernel,
        out_shape=jax.ShapeDtypeStruct((Rp, g), x.dtype),
        grid_spec=pltpu.PrefetchScalarGridSpec(
            num_scalar_prefetch=0,
            grid=(num_tiles,),
            in_specs=[
                pl.BlockSpec(memory_space=pltpu.MemorySpace.SMEM),   # scale scalar
                pl.BlockSpec((gL, g), lambda i: (0, 0)),             # W^T, resident
                pl.BlockSpec((tile, gL), lambda i: (i, 0)),          # packed rows
            ],
            out_specs=pl.BlockSpec((tile, g), lambda i: (i, 0)),
        ),
        compiler_params=pltpu.CompilerParams(
            dimension_semantics=("parallel",),
            vmem_limit_bytes=vmem_limit,
        ),
    )(scale, wt, x_packed)

    # (Rp, g) rows are the original rows in order (r = p*g + k) -> free reshape.
    return out2d.reshape(lead)


if __name__ == "__main__":
    key = jax.random.PRNGKey(0)

    def ref_fn(xx, r=0.85):
        return (jnp.mean(xx.astype(jnp.float32), axis=-1) * jnp.float32(r)).astype(xx.dtype)

    # Lane folding (L=16, g=8), non-pow2 row count (g=6), and L >= 128 (g=1).
    shapes = [(2, 4, 16, 16), (2, 3, 50, 16), (2, 2, 8, 160)]
    for shp in shapes:
        key, sub = jax.random.split(key)
        x = jax.random.normal(sub, shp, dtype=jnp.float32)
        out = jax.block_until_ready(spectral_rolloff(x, 0.85, min_pallas_bytes=0))
        assert out.shape == shp[:-1], (out.shape, shp)
        assert jnp.allclose(out, ref_fn(x), atol=1e-4, rtol=1e-4), shp

    # Multi-tile + ragged tail, g=1: Rp=400, forced tile=128 -> 4 tiles (last has 16 rows).
    key, sub = jax.random.split(key)
    x = jax.random.normal(sub, (2, 200, 128), dtype=jnp.float32)
    out = jax.block_until_ready(
        spectral_rolloff(x, 0.85, min_pallas_bytes=0, _force_tile=128))
    assert jnp.allclose(out, ref_fn(x), atol=1e-4, rtol=1e-4)

    # Multi-tile + ragged tail with lane folding, g=8: Rp=200 -> 2 tiles (128 + 72).
    key, sub = jax.random.split(key)
    x = jax.random.normal(sub, (10, 160, 16), dtype=jnp.float32)
    out = jax.block_until_ready(
        spectral_rolloff(x, 0.85, min_pallas_bytes=0, _force_tile=128))
    assert jnp.allclose(out, ref_fn(x), atol=1e-4, rtol=1e-4)

    # bf16 path: exact 0/1 W, scale applied in f32 post-matmul.
    key, sub = jax.random.split(key)
    xb = jax.random.normal(sub, (2, 4, 16, 16), dtype=jnp.bfloat16)
    outb = jax.block_until_ready(spectral_rolloff(xb, 0.85, min_pallas_bytes=0))
    assert jnp.allclose(outb.astype(jnp.float32), ref_fn(xb).astype(jnp.float32),
                        atol=2e-2, rtol=2e-2)

    # Auto path (tiny input -> XLA fallback) must agree as well.
    x = jax.random.normal(jax.random.PRNGKey(0), (2, 4, 16, 16), dtype=jnp.float32)
    auto = jax.block_until_ready(spectral_rolloff(x, 0.85))
    assert jnp.allclose(auto, ref_fn(x), atol=1e-4, rtol=1e-4)

    print("KERNEL_OK")
</pallas_src>

<mosaic_0001>
module attributes {stable_mosaic.version = 11 : i64} {
  func.func @_rolloff_kernel(%arg0: i32, %arg1: memref<1x1xf32, #tpu.memory_space<smem>>, %arg2: memref<128x8xf32, #tpu.memory_space<vmem>>, %arg3: memref<16x128xf32, #tpu.memory_space<vmem>>, %arg4: memref<16x8xf32, #tpu.memory_space<vmem>>) attributes {dimension_semantics = [#tpu.dimension_semantics<parallel>], iteration_bounds = array<i64: 1>, scalar_prefetch = 0 : i64, scratch_operands = 0 : i64, tpu.core_type = #tpu.core_type<tc>, window_params = [{transform_indices = @transform_0, window_bounds = array<i64: 1, 1>}, {pipeline_mode = #tpu.pipeline_mode<synchronous>, transform_indices = @transform_1, window_bounds = array<i64: 128, 8>}, {transform_indices = @transform_2, window_bounds = array<i64: 16, 128>}, {transform_indices = @transform_3, window_bounds = array<i64: 16, 8>}]} {
    %c0 = arith.constant 0 : index
    %c0_0 = arith.constant 0 : index
    %0 = vector.load %arg3[%c0, %c0_0] : memref<16x128xf32, #tpu.memory_space<vmem>>, vector<16x128xf32>
    %c0_1 = arith.constant 0 : index
    %c0_2 = arith.constant 0 : index
    %1 = vector.load %arg2[%c0_1, %c0_2] : memref<128x8xf32, #tpu.memory_space<vmem>>, vector<128x8xf32>
    %cst = arith.constant dense<0.000000e+00> : vector<16x8xf32>
    %2 = tpu.matmul %0, %1, %cst {dimension_numbers = #tpu.dot_dimension_numbers<[1], [0], [0], [1], [0, 0, 1, 1], [], []>} : vector<16x128xf32>, vector<128x8xf32>, vector<16x8xf32> -> vector<16x8xf32>
    %c0_3 = arith.constant 0 : index
    %c0_4 = arith.constant 0 : index
    %3 = memref.load %arg1[%c0_3, %c0_4] : memref<1x1xf32, #tpu.memory_space<smem>>
    %4 = vector.broadcast %3 : f32 to vector<16x8xf32>
    %5 = arith.mulf %2, %4 : vector<16x8xf32>
    %c0_5 = arith.constant 0 : index
    %c0_6 = arith.constant 0 : index
    %6 = vector.load %arg4[%c0_5, %c0_6] : memref<16x8xf32, #tpu.memory_space<vmem>>, vector<16x8xf32>
    tpu.vector_store %arg4[%c0_5, %c0_6], %5 {strides = array<i32>} : memref<16x8xf32, #tpu.memory_space<vmem>>, vector<16x8xf32>,
    return
  }
  func.func @transform_0(%arg0: i32) -> (i32, i32) {
    %c0_i32 = arith.constant 0 : i32
    %c0_i32_0 = arith.constant 0 : i32
    %c0_i32_1 = arith.constant 0 : i32
    return %c0_i32, %c0_i32_0 : i32, i32
  }
  func.func @transform_1(%arg0: i32) -> (i32, i32) {
    %c0_i32 = arith.constant 0 : i32
    %c0_i32_0 = arith.constant 0 : i32
    %c0_i32_1 = arith.constant 0 : i32
    return %c0_i32, %c0_i32_0 : i32, i32
  }
  func.func @transform_2(%arg0: i32) -> (i32, i32) {
    %c0_i32 = arith.constant 0 : i32
    %c0_i32_0 = arith.constant 0 : i32
    return %arg0, %c0_i32 : i32, i32
  }
  func.func @transform_3(%arg0: i32) -> (i32, i32) {
    %c0_i32 = arith.constant 0 : i32
    %c0_i32_0 = arith.constant 0 : i32
    return %arg0, %c0_i32 : i32, i32
  }
}

</mosaic_0001>

<llo_original>
// kernel: tpu_custom_call.1
$region0: #{tpu_custom_call.1}
  #allocation0 [shape = 'u32[]', space=smem, size = 0x4, offset = 0x4, fixed_abs, tag = 'smem constant byte address 0x4 - core index']
  #allocation1 [shape = 'u32[144,128]{1,0:T(1,128)}', space=vmem, size = 0x12000, scoped, tag = 'internal scratch']
  #allocation2 [shape = 'f32[1,1]{1,0:T(1,128)S(6)}', space=smem, size = 0x200, scoped, tag = 'scoped memory for tpu_custom_call.1']
  %s0 = inlined_call_operand.<no memory space> [shape: f32[1,1], index: 0, kind: input, shape index: {}]
  %s1 = inlined_call_operand.vmem [shape: f32[128,8], index: 1, kind: input, shape index: {}]
  %s2 = inlined_call_operand.vmem [shape: f32[16,128], index: 2, kind: input, shape index: {}]
  %s3 = inlined_call_operand.vmem [shape: f32[16,8], index: 3, kind: output, shape index: {}]
  %s4 = sld [smem:[#allocation0]]
  $region22: #{tpu_custom_call.1} parent=0
    _
  %s6 = ssub.s32 1, %s4
  %s7 = scalar_select 0, %s6, %s4
  %8 = sst [smem:[#allocation2]] %s0
  // Predicated region
  $region2: #{tpu_custom_call.1} parent=0 // pred_check
    _
  $region3: #{tpu_custom_call.1} parent=0 // pred_check_branch
    %10 = sbr.rel (0) target = $region5
  $region4: #{tpu_custom_call.1} parent=0 // pred_region
    _
  $region5: #{tpu_custom_call.1} parent=0 // pred_fallthru
    _
  // Predicated region
  $region6: #{tpu_custom_call.1} parent=0 // pred_check
    _
  $region7: #{tpu_custom_call.1} parent=0 // pred_check_branch
    %12 = sbr.rel (0) target = $region9
  $region8: #{tpu_custom_call.1} parent=0 // pred_region
    _
  $region9: #{tpu_custom_call.1} parent=0 // pred_fallthru
    _
  // Predicated region
  $region10: #{tpu_custom_call.1} parent=0 // pred_check
    _
  $region11: #{tpu_custom_call.1} parent=0 // pred_check_branch
    %14 = sbr.rel (0) target = $region13
  $region12: #{tpu_custom_call.1} parent=0 // pred_region
    _
  $region13: #{tpu_custom_call.1} parent=0 // pred_fallthru
    _
  %v15 = vld [vmem:[%s2] sm:$0xff]
  %v16 = vld [vmem:[%s2 + $0x8] sm:$0xff]
  %v17 = vld [vmem:[%s1] sm:$0xff]
  %v18 = vld [vmem:[%s1 + $0x8] sm:$0xff]
  %v19 = vld [vmem:[%s1 + $0x10] sm:$0xff]
  %v20 = vld [vmem:[%s1 + $0x18] sm:$0xff]
  %v21 = vld [vmem:[%s1 + $0x20] sm:$0xff]
  %v22 = vld [vmem:[%s1 + $0x28] sm:$0xff]
  %v23 = vld [vmem:[%s1 + $0x30] sm:$0xff]
  %v24 = vld [vmem:[%s1 + $0x38] sm:$0xff]
  %v25 = vld [vmem:[%s1 + $0x40] sm:$0xff]
  %v26 = vld [vmem:[%s1 + $0x48] sm:$0xff]
  %v27 = vld [vmem:[%s1 + $0x50] sm:$0xff]
  %v28 = vld [vmem:[%s1 + $0x58] sm:$0xff]
  %v29 = vld [vmem:[%s1 + $0x60] sm:$0xff]
  %v30 = vld [vmem:[%s1 + $0x68] sm:$0xff]
  %v31 = vld [vmem:[%s1 + $0x70] sm:$0xff]
  %v32 = vld [vmem:[%s1 + $0x78] sm:$0xff]
  %33 = vmatprep.subr.mxu0 0.0
  %34 = vmatpush1.msra.mxu0 %v17
  %35 = vmatprep.subr.mxu0 0.0
  %36 = vmatpush1.msra.mxu0 %v18
  %37 = vmatprep.subr.mxu0 0.0
  %38 = vmatpush1.msra.mxu0 %v19
  %39 = vmatprep.subr.mxu0 0.0
  %40 = vmatpush1.msra.mxu0 %v20
  %41 = vmatprep.subr.mxu0 0.0
  %42 = vmatpush1.msra.mxu0 %v21
  %43 = vmatprep.subr.mxu0 0.0
  %44 = vmatpush1.msra.mxu0 %v22
  %45 = vmatprep.subr.mxu0 0.0
  %46 = vmatpush1.msra.mxu0 %v23
  %47 = vmatprep.subr.mxu0 0.0
  %48 = vmatpush1.msra.mxu0 %v24
  %49 = vmatprep.subr.mxu0 0.0
  %50 = vmatpush1.msra.mxu0 %v25
  %51 = vmatprep.subr.mxu0 0.0
  %52 = vmatpush1.msra.mxu0 %v26
  %53 = vmatprep.subr.mxu0 0.0
  %54 = vmatpush1.msra.mxu0 %v27
  %55 = vmatprep.subr.mxu0 0.0
  %56 = vmatpush1.msra.mxu0 %v28
  %57 = vmatprep.subr.mxu0 0.0
  %58 = vmatpush1.msra.mxu0 %v29
  %59 = vmatprep.subr.mxu0 0.0
  %60 = vmatpush1.msra.mxu0 %v30
  %61 = vmatprep.subr.mxu0 0.0
  %62 = vmatpush1.msra.mxu0 %v31
  %63 = vmatprep.subr.mxu0 0.0
  %64 = vmatpush1.msra.mxu0 %v32
  %65 = vmatprep.subr.mxu0 0.0
  %66 = vmatpush1.msra.mxu0 0.0
  %67 = vmatprep.subr.mxu0 0.0
  %68 = vmatpush1.msra.mxu0 0.0
  %69 = vmatprep.subr.mxu0 0.0
  %70 = vmatpush1.msra.mxu0 0.0
  %71 = vmatprep.subr.mxu0 0.0
  %72 = vmatpush1.msra.mxu0 0.0
  %73 = vmatprep.subr.mxu0 0.0
  %74 = vmatpush1.msra.mxu0 0.0
  %75 = vmatprep.subr.mxu0 0.0
  %76 = vmatpush1.msra.mxu0 0.0
  %77 = vmatprep.subr.mxu0 0.0
  %78 = vmatpush1.msra.mxu0 0.0
  %79 = vmatprep.subr.mxu0 0.0
  %80 = vmatpush1.msra.mxu0 0.0
  %81 = vmatprep.subr.mxu0 0.0
  %82 = vmatpush1.msra.mxu0 0.0
  %83 = vmatprep.subr.mxu0 0.0
  %84 = vmatpush1.msra.mxu0 0.0
  %85 = vmatprep.subr.mxu0 0.0
  %86 = vmatpush1.msra.mxu0 0.0
  %87 = vmatprep.subr.mxu0 0.0
  %88 = vmatpush1.msra.mxu0 0.0
  %89 = vmatprep.subr.mxu0 0.0
  %90 = vmatpush1.msra.mxu0 0.0
  %91 = vmatprep.subr.mxu0 0.0
  %92 = vmatpush1.msra.mxu0 0.0
  %93 = vmatprep.subr.mxu0 0.0
  %94 = vmatpush1.msra.mxu0 0.0
  %95 = vmatprep.subr.mxu0 0.0
  %96 = vmatpush1.msra.mxu0 0.0
  %97 = vmatprep.mubr.f32.mxu0 0.0
  %98 = vmatmul.mubr.f32.gmra.mrb[0].mxu0 %v15
  %v99 = vpop.f32.mrb[0].mxu0
  %v100 = vadd.f32 0.0, %v99
  %v101 = vpop.f32.mrb[0].mxu0
  %102 = vmatprep.mubr.f32.mxu0 0.0
  %103 = vmatmul.mubr.f32.gmra.mrb[0].mxu0 %v16
  %v104 = vpop.f32.mrb[0].mxu0
  %v105 = vadd.f32 0.0, %v104
  %v106 = vpop.f32.mrb[0].mxu0
  %107 = vdwg.mxu0
  %s108 = sld [smem:[#allocation2]]
  %v109 = vstv %s108
  %v110 = vmul.f32 %v100, %v109
  %v111 = vmul.f32 %v105, %v109
  %vm112 = vcmask 64512
  %113 = vst.msk [vmem:[%s3] sm:$0xff] %vm112, %v110
  %114 = vst.msk [vmem:[%s3 + $0x8] sm:$0xff] %vm112, %v111
  // Predicated region
  $region14: #{tpu_custom_call.1} parent=0 // pred_check
    _
  $region15: #{tpu_custom_call.1} parent=0 // pred_check_branch
    %116 = sbr.rel (0) target = $region17
  $region16: #{tpu_custom_call.1} parent=0 // pred_region
    _
  $region17: #{tpu_custom_call.1} parent=0 // pred_fallthru
    _
  // Predicated region
  $region18: #{tpu_custom_call.1} parent=0 // pred_check
    _
  $region19: #{tpu_custom_call.1} parent=0 // pred_check_branch
    %118 = sbr.rel (0) target = $region21
  $region20: #{tpu_custom_call.1} parent=0 // pred_region
    _
  $region21: #{tpu_custom_call.1} parent=0 // pred_fallthru
    _

</llo_original>
